<compile_context>
chip_gen: v7x
topology: tpu7x:2x2x1
jax: 0.10.0
libtpu: 0.0.40
codegen_flags: <defaults>
</compile_context>

<pallas_src>
import functools
import math

import jax
import jax.numpy as jnp
from jax.experimental import pallas as pl
from jax.experimental.pallas import tpu as pltpu


def _round_up(x, m):
    return ((x + m - 1) // m) * m


def rbf_act_kernel(coef_ref, centers_ref, x_ref, w_ref, o_ref, *,
                   n_basis, use_recurrence):
    """coef_ref:    SMEM (3,)  = [-gamma, 2*gamma*d0, 2*gamma*delta]
       centers_ref: SMEM (n_basis,)            (only read by the direct path)
       x_ref/o_ref: VMEM (C, bn) lane-dense tiles (batch on lanes)
       w_ref:       VMEM (C, n_basis) weights; recurrence path gets W*exp(-gamma*d_j^2)."""
    x = x_ref[...]                       # (C, bn) f32
    w = w_ref[...]                       # (C, n_basis) f32 — loaded once (hoisted)
    neg_gamma = coef_ref[0]              # scalar from SMEM, read once

    if use_recurrence:
        a1 = coef_ref[1]                 # 2*gamma*d0
        a3 = coef_ref[2]                 # 2*gamma*delta
        # phi_j = exp(-g*x^2 + 2*g*d0*x) * r^j * exp(-g*d_j^2); last factor folded into w.
        # The running term e0*r^j = phi_j * exp(g*d_j^2) is bounded by exp(g*d_j^2).
        e0 = jnp.exp(x * (a1 + neg_gamma * x))   # EUP exp #1
        r = jnp.exp(a3 * x)                      # EUP exp #2
        r2 = r * r
        t_even = e0                              # j = 0, 2, 4, ...
        t_odd = e0 * r                           # j = 1, 3, 5, ...
        acc0 = w[:, 0:1] * t_even                # (C,1) broadcasts over lanes
        acc1 = w[:, 1:2] * t_odd
        for j in range(2, n_basis):              # static unroll; two interleaved chains
            if j % 2 == 0:
                t_even = t_even * r2
                acc0 = acc0 + w[:, j:j + 1] * t_even
            else:
                t_odd = t_odd * r2
                acc1 = acc1 + w[:, j:j + 1] * t_odd
        o_ref[...] = acc0 + acc1
    else:
        # Exact fallback: one exp per basis center.
        acc0 = jnp.zeros_like(x)
        acc1 = jnp.zeros_like(x)
        for j in range(n_basis):                 # static unroll
            diff = x - centers_ref[j]
            phi = jnp.exp(neg_gamma * diff * diff)
            term = w[:, j:j + 1] * phi
            if j % 2 == 0:
                acc0 = acc0 + term
            else:
                acc1 = acc1 + term
        o_ref[...] = acc0 + acc1


def kernel_activation(x, w, centers, gamma, *, block_n=2048, use_recurrence=None):
    """x: (N, C) f32, w: (C, n_basis) f32 grouped-conv weight,
       centers: (n_basis,) f32, gamma: (1,) f32.  Returns (N, C) f32."""
    n, c = x.shape
    n_basis = centers.shape[0]

    # Fast-path gate (concrete module buffers): the bounded intermediate of the
    # recurrence is exp(gamma * max_j d_j^2); require it to sit well inside f32 range.
    if use_recurrence is None:
        use_recurrence = (n_basis >= 2 and
                          float(gamma[0]) * float(jnp.max(centers * centers)) < 60.0)
    use_recurrence = bool(use_recurrence) and n_basis >= 2

    if use_recurrence:
        delta = centers[1] - centers[0]
        coef = jnp.stack([-gamma[0],
                          2.0 * gamma[0] * centers[0],
                          2.0 * gamma[0] * delta]).astype(jnp.float32)
        # Fold exp(-gamma*d_j^2) into the weights offline.
        w_eff = (w * jnp.exp(-gamma[0] * centers * centers)[None, :]).astype(jnp.float32)
    else:
        coef = jnp.stack([-gamma[0],
                          jnp.zeros_like(gamma[0]),
                          jnp.zeros_like(gamma[0])]).astype(jnp.float32)
        w_eff = w.astype(jnp.float32)

    # Lane-dense layout: (N, C) -> (C, N_pad); batch on the 128-wide lane axis.
    bn = min(block_n, _round_up(n, 128))         # lane tile, multiple of 128
    n_pad = _round_up(n, bn)
    x_t = x.T.astype(jnp.float32)
    if n_pad != n:
        x_t = jnp.pad(x_t, ((0, 0), (0, n_pad - n)))

    body = functools.partial(rbf_act_kernel, n_basis=n_basis,
                             use_recurrence=use_recurrence)
    out_t = pl.pallas_call(
        body,
        out_shape=jax.ShapeDtypeStruct((c, n_pad), jnp.float32),
        grid=(n_pad // bn,),
        in_specs=[
            pl.BlockSpec(memory_space=pltpu.MemorySpace.SMEM),   # coef   (3,)
            pl.BlockSpec(memory_space=pltpu.MemorySpace.SMEM),   # centers (n_basis,)
            pl.BlockSpec((c, bn), lambda i: (0, i)),             # x tile (pipelined)
            pl.BlockSpec((c, n_basis), lambda i: (0, 0)),        # weights (resident)
        ],
        out_specs=pl.BlockSpec((c, bn), lambda i: (0, i)),
        compiler_params=pltpu.CompilerParams(
            dimension_semantics=("parallel",)),                  # megacore on v7x
    )(coef, centers.astype(jnp.float32), x_t, w_eff)

    return out_t[:, :n].T                                        # back to (N, C)


def ref_forward(x, w, centers, gamma):
    phi = jnp.exp(-gamma[0] * (x[:, :, None] - centers[None, None, :]) ** 2)  # (N,C,B)
    return jnp.einsum("ncb,cb->nc", phi, w)


if __name__ == "__main__":
    # Module hyperparameters (synthetic, deterministic).
    n_basis, span, channels = 16, 2.0, 4
    batch = 2

    # register_buffer('dict', linspace(-span, span, n_basis)); gamma derived from it.
    centers = jnp.linspace(-span, span, n_basis).astype(jnp.float32)
    gamma = (1.0 / (6.0 * (centers[-1] - centers[-2]) ** 2)).reshape(1).astype(jnp.float32)

    # Deterministic parameter / input init (mimics Conv1d uniform(-1/sqrt(fan_in), .)).
    key = jax.random.PRNGKey(0)
    kx, kw = jax.random.split(key)
    x = jax.random.normal(kx, (batch, channels), dtype=jnp.float32)
    bound = 1.0 / math.sqrt(n_basis)                    # fan_in = n_basis per group
    w = jax.random.uniform(kw, (channels, n_basis), jnp.float32, -bound, bound)  # (C, B)

    expected = ref_forward(x, w, centers, gamma)

    # Fast (geometric-recurrence) path: exponent is algebraically reassociated,
    # so allow a slightly looser f32 tolerance.
    out_fast = jax.block_until_ready(kernel_activation(x, w, centers, gamma))
    assert out_fast.shape == (batch, channels) and out_fast.dtype == jnp.float32
    assert jnp.allclose(out_fast, expected, atol=1e-4, rtol=1e-4)

    # Exact per-basis-exp fallback path (the gated alternative) — bit-faithful math.
    out_direct = jax.block_until_ready(
        kernel_activation(x, w, centers, gamma, use_recurrence=False))
    assert out_direct.shape == (batch, channels)
    assert jnp.allclose(out_direct, expected, atol=1e-5, rtol=1e-5)

    print("KERNEL_OK")
</pallas_src>

<mosaic_0001>
module attributes {stable_mosaic.version = 11 : i64} {
  func.func @rbf_act_kernel(%arg0: i32, %arg1: memref<3xf32, #tpu.memory_space<smem>>, %arg2: memref<16xf32, #tpu.memory_space<smem>>, %arg3: memref<4x128xf32, #tpu.memory_space<vmem>>, %arg4: memref<4x16xf32, #tpu.memory_space<vmem>>, %arg5: memref<4x128xf32, #tpu.memory_space<vmem>>) attributes {dimension_semantics = [#tpu.dimension_semantics<parallel>], iteration_bounds = array<i64: 1>, scalar_prefetch = 0 : i64, scratch_operands = 0 : i64, tpu.core_type = #tpu.core_type<tc>, window_params = [{transform_indices = @transform_0, window_bounds = array<i64: 3>}, {transform_indices = @transform_1, window_bounds = array<i64: 16>}, {transform_indices = @transform_2, window_bounds = array<i64: 4, 128>}, {pipeline_mode = #tpu.pipeline_mode<synchronous>, transform_indices = @transform_3, window_bounds = array<i64: 4, 16>}, {transform_indices = @transform_4, window_bounds = array<i64: 4, 128>}]} {
    %c0 = arith.constant 0 : index
    %c0_0 = arith.constant 0 : index
    %0 = vector.load %arg3[%c0, %c0_0] : memref<4x128xf32, #tpu.memory_space<vmem>>, vector<4x128xf32>
    %c0_1 = arith.constant 0 : index
    %c0_2 = arith.constant 0 : index
    %1 = vector.load %arg4[%c0_1, %c0_2] : memref<4x16xf32, #tpu.memory_space<vmem>>, vector<4x16xf32>
    %c0_3 = arith.constant 0 : index
    %2 = memref.load %arg1[%c0_3] : memref<3xf32, #tpu.memory_space<smem>>
    %c1 = arith.constant 1 : index
    %3 = memref.load %arg1[%c1] : memref<3xf32, #tpu.memory_space<smem>>
    %c2 = arith.constant 2 : index
    %4 = memref.load %arg1[%c2] : memref<3xf32, #tpu.memory_space<smem>>
    %5 = vector.broadcast %2 : f32 to vector<4x128xf32>
    %6 = arith.mulf %5, %0 : vector<4x128xf32>
    %7 = vector.broadcast %3 : f32 to vector<4x128xf32>
    %8 = arith.addf %7, %6 : vector<4x128xf32>
    %9 = arith.mulf %0, %8 : vector<4x128xf32>
    %10 = math.exp %9 : vector<4x128xf32>
    %11 = vector.broadcast %4 : f32 to vector<4x128xf32>
    %12 = arith.mulf %11, %0 : vector<4x128xf32>
    %13 = math.exp %12 : vector<4x128xf32>
    %14 = arith.mulf %13, %13 : vector<4x128xf32>
    %15 = arith.mulf %10, %13 : vector<4x128xf32>
    %16 = vector.extract_strided_slice %1 {offsets = [0, 0], sizes = [4, 1], strides = [1, 1]} : vector<4x16xf32> to vector<4x1xf32>
    %17 = vector.broadcast %16 : vector<4x1xf32> to vector<4x128xf32>
    %18 = arith.mulf %17, %10 : vector<4x128xf32>
    %19 = vector.extract_strided_slice %1 {offsets = [0, 1], sizes = [4, 1], strides = [1, 1]} : vector<4x16xf32> to vector<4x1xf32>
    %20 = vector.broadcast %19 : vector<4x1xf32> to vector<4x128xf32>
    %21 = arith.mulf %20, %15 : vector<4x128xf32>
    %22 = arith.mulf %10, %14 : vector<4x128xf32>
    %23 = vector.extract_strided_slice %1 {offsets = [0, 2], sizes = [4, 1], strides = [1, 1]} : vector<4x16xf32> to vector<4x1xf32>
    %24 = vector.broadcast %23 : vector<4x1xf32> to vector<4x128xf32>
    %25 = arith.mulf %24, %22 : vector<4x128xf32>
    %26 = arith.addf %18, %25 : vector<4x128xf32>
    %27 = arith.mulf %15, %14 : vector<4x128xf32>
    %28 = vector.extract_strided_slice %1 {offsets = [0, 3], sizes = [4, 1], strides = [1, 1]} : vector<4x16xf32> to vector<4x1xf32>
    %29 = vector.broadcast %28 : vector<4x1xf32> to vector<4x128xf32>
    %30 = arith.mulf %29, %27 : vector<4x128xf32>
    %31 = arith.addf %21, %30 : vector<4x128xf32>
    %32 = arith.mulf %22, %14 : vector<4x128xf32>
    %33 = vector.extract_strided_slice %1 {offsets = [0, 4], sizes = [4, 1], strides = [1, 1]} : vector<4x16xf32> to vector<4x1xf32>
    %34 = vector.broadcast %33 : vector<4x1xf32> to vector<4x128xf32>
    %35 = arith.mulf %34, %32 : vector<4x128xf32>
    %36 = arith.addf %26, %35 : vector<4x128xf32>
    %37 = arith.mulf %27, %14 : vector<4x128xf32>
    %38 = vector.extract_strided_slice %1 {offsets = [0, 5], sizes = [4, 1], strides = [1, 1]} : vector<4x16xf32> to vector<4x1xf32>
    %39 = vector.broadcast %38 : vector<4x1xf32> to vector<4x128xf32>
    %40 = arith.mulf %39, %37 : vector<4x128xf32>
    %41 = arith.addf %31, %40 : vector<4x128xf32>
    %42 = arith.mulf %32, %14 : vector<4x128xf32>
    %43 = vector.extract_strided_slice %1 {offsets = [0, 6], sizes = [4, 1], strides = [1, 1]} : vector<4x16xf32> to vector<4x1xf32>
    %44 = vector.broadcast %43 : vector<4x1xf32> to vector<4x128xf32>
    %45 = arith.mulf %44, %42 : vector<4x128xf32>
    %46 = arith.addf %36, %45 : vector<4x128xf32>
    %47 = arith.mulf %37, %14 : vector<4x128xf32>
    %48 = vector.extract_strided_slice %1 {offsets = [0, 7], sizes = [4, 1], strides = [1, 1]} : vector<4x16xf32> to vector<4x1xf32>
    %49 = vector.broadcast %48 : vector<4x1xf32> to vector<4x128xf32>
    %50 = arith.mulf %49, %47 : vector<4x128xf32>
    %51 = arith.addf %41, %50 : vector<4x128xf32>
    %52 = arith.mulf %42, %14 : vector<4x128xf32>
    %53 = vector.extract_strided_slice %1 {offsets = [0, 8], sizes = [4, 1], strides = [1, 1]} : vector<4x16xf32> to vector<4x1xf32>
    %54 = vector.broadcast %53 : vector<4x1xf32> to vector<4x128xf32>
    %55 = arith.mulf %54, %52 : vector<4x128xf32>
    %56 = arith.addf %46, %55 : vector<4x128xf32>
    %57 = arith.mulf %47, %14 : vector<4x128xf32>
    %58 = vector.extract_strided_slice %1 {offsets = [0, 9], sizes = [4, 1], strides = [1, 1]} : vector<4x16xf32> to vector<4x1xf32>
    %59 = vector.broadcast %58 : vector<4x1xf32> to vector<4x128xf32>
    %60 = arith.mulf %59, %57 : vector<4x128xf32>
    %61 = arith.addf %51, %60 : vector<4x128xf32>
    %62 = arith.mulf %52, %14 : vector<4x128xf32>
    %63 = vector.extract_strided_slice %1 {offsets = [0, 10], sizes = [4, 1], strides = [1, 1]} : vector<4x16xf32> to vector<4x1xf32>
    %64 = vector.broadcast %63 : vector<4x1xf32> to vector<4x128xf32>
    %65 = arith.mulf %64, %62 : vector<4x128xf32>
    %66 = arith.addf %56, %65 : vector<4x128xf32>
    %67 = arith.mulf %57, %14 : vector<4x128xf32>
    %68 = vector.extract_strided_slice %1 {offsets = [0, 11], sizes = [4, 1], strides = [1, 1]} : vector<4x16xf32> to vector<4x1xf32>
    %69 = vector.broadcast %68 : vector<4x1xf32> to vector<4x128xf32>
    %70 = arith.mulf %69, %67 : vector<4x128xf32>
    %71 = arith.addf %61, %70 : vector<4x128xf32>
    %72 = arith.mulf %62, %14 : vector<4x128xf32>
    %73 = vector.extract_strided_slice %1 {offsets = [0, 12], sizes = [4, 1], strides = [1, 1]} : vector<4x16xf32> to vector<4x1xf32>
    %74 = vector.broadcast %73 : vector<4x1xf32> to vector<4x128xf32>
    %75 = arith.mulf %74, %72 : vector<4x128xf32>
    %76 = arith.addf %66, %75 : vector<4x128xf32>
    %77 = arith.mulf %67, %14 : vector<4x128xf32>
    %78 = vector.extract_strided_slice %1 {offsets = [0, 13], sizes = [4, 1], strides = [1, 1]} : vector<4x16xf32> to vector<4x1xf32>
    %79 = vector.broadcast %78 : vector<4x1xf32> to vector<4x128xf32>
    %80 = arith.mulf %79, %77 : vector<4x128xf32>
    %81 = arith.addf %71, %80 : vector<4x128xf32>
    %82 = arith.mulf %72, %14 : vector<4x128xf32>
    %83 = vector.extract_strided_slice %1 {offsets = [0, 14], sizes = [4, 1], strides = [1, 1]} : vector<4x16xf32> to vector<4x1xf32>
    %84 = vector.broadcast %83 : vector<4x1xf32> to vector<4x128xf32>
    %85 = arith.mulf %84, %82 : vector<4x128xf32>
    %86 = arith.addf %76, %85 : vector<4x128xf32>
    %87 = arith.mulf %77, %14 : vector<4x128xf32>
    %88 = vector.extract_strided_slice %1 {offsets = [0, 15], sizes = [4, 1], strides = [1, 1]} : vector<4x16xf32> to vector<4x1xf32>
    %89 = vector.broadcast %88 : vector<4x1xf32> to vector<4x128xf32>
    %90 = arith.mulf %89, %87 : vector<4x128xf32>
    %91 = arith.addf %81, %90 : vector<4x128xf32>
    %92 = arith.addf %86, %91 : vector<4x128xf32>
    %c0_4 = arith.constant 0 : index
    %c0_5 = arith.constant 0 : index
    %93 = vector.load %arg5[%c0_4, %c0_5] : memref<4x128xf32, #tpu.memory_space<vmem>>, vector<4x128xf32>
    tpu.vector_store %arg5[%c0_4, %c0_5], %92 {strides = array<i32>} : memref<4x128xf32, #tpu.memory_space<vmem>>, vector<4x128xf32>,
    return
  }
  func.func @transform_0(%arg0: i32) -> i32 {
    %c0_i32 = arith.constant 0 : i32
    %c0_i32_0 = arith.constant 0 : i32
    return %c0_i32 : i32
  }
  func.func @transform_1(%arg0: i32) -> i32 {
    %c0_i32 = arith.constant 0 : i32
    %c0_i32_0 = arith.constant 0 : i32
    return %c0_i32 : i32
  }
  func.func @transform_2(%arg0: i32) -> (i32, i32) {
    %c0_i32 = arith.constant 0 : i32
    %c0_i32_0 = arith.constant 0 : i32
    return %c0_i32, %arg0 : i32, i32
  }
  func.func @transform_3(%arg0: i32) -> (i32, i32) {
    %c0_i32 = arith.constant 0 : i32
    %c0_i32_0 = arith.constant 0 : i32
    %c0_i32_1 = arith.constant 0 : i32
    return %c0_i32, %c0_i32_0 : i32, i32
  }
  func.func @transform_4(%arg0: i32) -> (i32, i32) {
    %c0_i32 = arith.constant 0 : i32
    %c0_i32_0 = arith.constant 0 : i32
    return %c0_i32, %arg0 : i32, i32
  }
}

</mosaic_0001>

<llo_original>
// kernel: tpu_custom_call.1
$region0: #{tpu_custom_call.1}
  #allocation0 [shape = 'u32[]', space=smem, size = 0x4, offset = 0x4, fixed_abs, tag = 'smem constant byte address 0x4 - core index']
  #allocation1 [shape = 'u32[144,128]{1,0:T(1,128)}', space=vmem, size = 0x12000, scoped, tag = 'internal scratch']
  %s0 = inlined_call_operand.hbm [shape: f32[3], index: 0, kind: input, shape index: {}]
  %s1 = inlined_call_operand.vmem [shape: f32[16], index: 1, kind: input, shape index: {}]
  %s2 = inlined_call_operand.vmem [shape: f32[4,128], index: 2, kind: input, shape index: {}]
  %s3 = inlined_call_operand.vmem [shape: f32[4,16], index: 3, kind: input, shape index: {}]
  %s4 = inlined_call_operand.hbm [shape: f32[4,128], index: 4, kind: output, shape index: {}]
  %s5 = sld [smem:[#allocation0]]
  $region34: #{tpu_custom_call.1} parent=0
    _
  %s7 = ssub.s32 1, %s5
  %s8 = scalar_select 0, %s7, %s5
  $region1: #{tpu_custom_call.1} parent=0
    #allocation2 [shape = 'u8[512]{0}', space=smem, size = 0x200, scoped, tag = 'input window, operand 0, single buffered']
    #allocation3 [shape = 's32[1]{0}', space=sflag, size = 0x4, scoped, tag = 'scoped memory for tpu_custom_call.1']
    #allocation4 [shape = 's32[1]{0}', space=sflag, size = 0x4, scoped, tag = 'scoped memory for tpu_custom_call.1']
    #allocation5 [shape = 's32[1]{0}', space=sflag, size = 0x4, scoped, tag = 'scoped memory for tpu_custom_call.1']
    #allocation6 [shape = 'u8[512]{0}', space=smem, size = 0x200, scoped, tag = 'input window, operand 1, single buffered']
    #allocation7 [shape = 'u8[2048]{0}', space=vmem, size = 0x800, scoped, tag = 'output window, operand 0, single buffered']
    %9 = vsyncpa [#allocation4], 0
    %10 = vsyncpa [#allocation5], 0
    %11 = vsyncpa [#allocation3], 0
    // Predicated region
    $region2: #{tpu_custom_call.1} parent=1 // pred_check
      _
    $region3: #{tpu_custom_call.1} parent=1 // pred_check_branch
      %13 = sbr.rel (0) target = $region5
    $region4: #{tpu_custom_call.1} parent=1 // pred_region
      %s15 = ssub.s32 16, 16
      %16 = vsyncadd [#allocation4], %s15
      %19 = dma.hbm_to_smem %s0, 16, [#allocation2], [#allocation4]
    $region5: #{tpu_custom_call.1} parent=1 // pred_fallthru
      _
    // Predicated region
    $region6: #{tpu_custom_call.1} parent=1 // pred_check
      _
    $region7: #{tpu_custom_call.1} parent=1 // pred_check_branch
      %21 = sbr.rel (0) target = $region9
    $region8: #{tpu_custom_call.1} parent=1 // pred_region
      %s23 = ssub.s32 16, 16
      %24 = vsyncadd [#allocation5], %s23
      %s26 = sshll.u32 %s1, 4
      %s27 = int_to_ptr.vmem [resolvable:$true] %s26
      %29 = dma.vmem_to_smem %s27, 16, [#allocation6], [#allocation5]
    $region9: #{tpu_custom_call.1} parent=1 // pred_fallthru
      _
    // Predicated region
    $region10: #{tpu_custom_call.1} parent=1 // pred_check
      _
    $region11: #{tpu_custom_call.1} parent=1 // pred_check_branch
      %31 = sbr.rel (0) target = $region13
    $region12: #{tpu_custom_call.1} parent=1 // pred_region
      _
    $region13: #{tpu_custom_call.1} parent=1 // pred_fallthru
      _
    // Predicated region
    $region14: #{tpu_custom_call.1} parent=1 // pred_check
      _
    $region15: #{tpu_custom_call.1} parent=1 // pred_check_branch
      %33 = sbr.rel (0) target = $region17
    $region16: #{tpu_custom_call.1} parent=1 // pred_region
      _
    $region17: #{tpu_custom_call.1} parent=1 // pred_fallthru
      _
    // Predicated region
    $region18: #{tpu_custom_call.1} parent=1 // pred_check
      _
    $region19: #{tpu_custom_call.1} parent=1 // pred_check_branch
      %35 = sbr.rel (0) target = $region21
    $region20: #{tpu_custom_call.1} parent=1 // pred_region
      %36 = dma.done [#allocation4], 16
    $region21: #{tpu_custom_call.1} parent=1 // pred_fallthru
      _
    // Predicated region
    $region22: #{tpu_custom_call.1} parent=1 // pred_check
      _
    $region23: #{tpu_custom_call.1} parent=1 // pred_check_branch
      %38 = sbr.rel (0) target = $region25
    $region24: #{tpu_custom_call.1} parent=1 // pred_region
      %39 = dma.done [#allocation5], 16
    $region25: #{tpu_custom_call.1} parent=1 // pred_fallthru
      _
    %40 = sfence
    %v41 = vld [vmem:[%s2] sm:$0xf]
    %v42 = vld [vmem:[%s3] sm:$0xf]
    %s43 = sld [smem:[#allocation2]]
    %s44 = sld [smem:[#allocation2 + $0x1]]
    %s45 = sld [smem:[#allocation2 + $0x2]]
    %v46 = vstv %s43
    %v47 = vmul.f32 %v46, %v41
    %v48 = vstv %s44
    %v49 = vadd.f32 %v48, %v47
    %v50 = vmul.f32 %v41, %v49
    %v51 = vmul.f32 %v50, 1.442695
    %v52 = vpow.pop %v51
    %v53 = vstv %s45
    %v54 = vmul.f32 %v53, %v41
    %v55 = vmul.f32 %v54, 1.442695
    %v56 = vpow.pop %v55
    %v57 = vmul.f32 %v56, %v56
    %v58 = vmul.f32 %v52, %v56
    %60 = vset.pattern.permute.xlu0 0
    %61 = vperm.xlu0 %60, %v42
    %v62 = vpop.permute.xlu0 %61
    %v64 = vmul.f32 %v62, %v52
    %65 = vset.pattern.permute.xlu0 1
    %66 = vperm.xlu0 %65, %v42
    %v67 = vpop.permute.xlu0 %66
    %v69 = vmul.f32 %v67, %v58
    %v70 = vmul.f32 %v52, %v57
    %71 = vset.pattern.permute.xlu0 2
    %72 = vperm.xlu0 %71, %v42
    %v73 = vpop.permute.xlu0 %72
    %v75 = vmul.f32 %v73, %v70
    %v76 = vadd.f32 %v64, %v75
    %v77 = vmul.f32 %v58, %v57
    %78 = vset.pattern.permute.xlu0 3
    %79 = vperm.xlu0 %78, %v42
    %v80 = vpop.permute.xlu0 %79
    %v82 = vmul.f32 %v80, %v77
    %v83 = vadd.f32 %v69, %v82
    %v84 = vmul.f32 %v70, %v57
    %85 = vset.pattern.permute.xlu0 4
    %86 = vperm.xlu0 %85, %v42
    %v87 = vpop.permute.xlu0 %86
    %v89 = vmul.f32 %v87, %v84
    %v90 = vadd.f32 %v76, %v89
    %v91 = vmul.f32 %v77, %v57
    %92 = vset.pattern.permute.xlu0 5
    %93 = vperm.xlu0 %92, %v42
    %v94 = vpop.permute.xlu0 %93
    %v96 = vmul.f32 %v94, %v91
    %v97 = vadd.f32 %v83, %v96
    %v98 = vmul.f32 %v84, %v57
    %99 = vset.pattern.permute.xlu0 6
    %100 = vperm.xlu0 %99, %v42
    %v101 = vpop.permute.xlu0 %100
    %v103 = vmul.f32 %v101, %v98
    %v104 = vadd.f32 %v90, %v103
    %v105 = vmul.f32 %v91, %v57
    %106 = vset.pattern.permute.xlu0 7
    %107 = vperm.xlu0 %106, %v42
    %v108 = vpop.permute.xlu0 %107
    %v110 = vmul.f32 %v108, %v105
    %v111 = vadd.f32 %v97, %v110
    %v112 = vmul.f32 %v98, %v57
    %113 = vset.pattern.permute.xlu0 8
    %114 = vperm.xlu0 %113, %v42
    %v115 = vpop.permute.xlu0 %114
    %v117 = vmul.f32 %v115, %v112
    %v118 = vadd.f32 %v104, %v117
    %v119 = vmul.f32 %v105, %v57
    %120 = vset.pattern.permute.xlu0 9
    %121 = vperm.xlu0 %120, %v42
    %v122 = vpop.permute.xlu0 %121
    %v124 = vmul.f32 %v122, %v119
    %v125 = vadd.f32 %v111, %v124
    %v126 = vmul.f32 %v112, %v57
    %127 = vset.pattern.permute.xlu0 10
    %128 = vperm.xlu0 %127, %v42
    %v129 = vpop.permute.xlu0 %128
    %v131 = vmul.f32 %v129, %v126
    %v132 = vadd.f32 %v118, %v131
    %v133 = vmul.f32 %v119, %v57
    %134 = vset.pattern.permute.xlu0 11
    %135 = vperm.xlu0 %134, %v42
    %v136 = vpop.permute.xlu0 %135
    %v138 = vmul.f32 %v136, %v133
    %v139 = vadd.f32 %v125, %v138
    %v140 = vmul.f32 %v126, %v57
    %141 = vset.pattern.permute.xlu0 12
    %142 = vperm.xlu0 %141, %v42
    %v143 = vpop.permute.xlu0 %142
    %v145 = vmul.f32 %v143, %v140
    %v146 = vadd.f32 %v132, %v145
    %v147 = vmul.f32 %v133, %v57
    %148 = vset.pattern.permute.xlu0 13
    %149 = vperm.xlu0 %148, %v42
    %v150 = vpop.permute.xlu0 %149
    %v152 = vmul.f32 %v150, %v147
    %v153 = vadd.f32 %v139, %v152
    %v154 = vmul.f32 %v140, %v57
    %155 = vset.pattern.permute.xlu0 14
    %156 = vperm.xlu0 %155, %v42
    %v157 = vpop.permute.xlu0 %156
    %v159 = vmul.f32 %v157, %v154
    %v160 = vadd.f32 %v146, %v159
    %v161 = vmul.f32 %v147, %v57
    %162 = vset.pattern.permute.xlu0 15
    %163 = vperm.xlu0 %162, %v42
    %v164 = vpop.permute.xlu0 %163
    %v166 = vmul.f32 %v164, %v161
    %v167 = vadd.f32 %v153, %v166
    %v168 = vadd.f32 %v160, %v167
    %169 = vst [vmem:[#allocation7] sm:$0xf] %v168
    // Predicated region
    $region26: #{tpu_custom_call.1} parent=1 // pred_check
      _
    $region27: #{tpu_custom_call.1} parent=1 // pred_check_branch
      %171 = sbr.rel (0) target = $region29
    $region28: #{tpu_custom_call.1} parent=1 // pred_region
      %s173 = ssub.s32 64, 64
      %174 = vsyncadd [#allocation3], %s173
      %s176 = sshll.u32 [#allocation7], 4
      %s177 = int_to_ptr.vmem [resolvable:$true] %s176
      %179 = dma.vmem_to_hbm [thread:$0]  %s177, 64, %s4, [#allocation3]
    $region29: #{tpu_custom_call.1} parent=1 // pred_fallthru
      _
    // Predicated region
    $region30: #{tpu_custom_call.1} parent=1 // pred_check
      _
    $region31: #{tpu_custom_call.1} parent=1 // pred_check_branch
      %181 = sbr.rel (0) target = $region33
    $region32: #{tpu_custom_call.1} parent=1 // pred_region
      %182 = dma.done [#allocation3], 64
    $region33: #{tpu_custom_call.1} parent=1 // pred_fallthru
      _
    %183 = vsyncpa [#allocation3], 1
    %184 = vsyncpa [#allocation4], 1
    %185 = vsyncpa [#allocation5], 1

</llo_original>
